<compile_context>
chip_gen: v6e
topology: v6e:2x2x1
jax: 0.10.0
libtpu: 0.0.40
codegen_flags: <defaults>
</compile_context>

<pallas_src>
import functools

import jax
import jax.numpy as jnp
from jax.experimental import pallas as pl
from jax.experimental.pallas import tpu as pltpu

LANE = 128
CHUNK_R = 256          # rows per in-kernel accumulation chunk (128 KiB f32)
_MIB = 1 << 20


def _device_kind() -> str:
    try:
        return jax.devices()[0].device_kind.lower()
    except Exception:
        return ""


def _tensorcores_per_device() -> int:
    """Best-effort TensorCore count per JAX device (width of the split axis)."""
    kind = _device_kind()
    # v5e / v6e ("lite") chips have a single TensorCore -> no split axis.
    if "lite" in kind or "v5e" in kind or "v6e" in kind:
        return 1
    # v4 / v5p (megacore) and v7x expose 2 TensorCores per device.
    if "v4" in kind or "v5p" in kind or "v7" in kind or "7x" in kind:
        return 2
    return 1   # unknown: be conservative (no dead steps, no wasted re-reads)


def _step_bytes_budget() -> int:
    """HBM bytes (both inputs combined) streamed per grid step, per generation."""
    kind = _device_kind()
    if "v7" in kind or "7x" in kind:
        return 8 * _MIB     # 3.2 TB/s: amortize the ~0.35us/step overhead
    if "v6" in kind:
        return 4 * _MIB
    return 2 * _MIB         # v5e / unknown: stay well under 16 MiB scoped VMEM


def _iou_partial_kernel(o_ref, t_ref, swt_ref, sw_ref, st_ref, *,
                        tile_r, chunk_r, steps_per_split, nblocks_real,
                        m_rows, need_mask, apply_sigmoid):
    s = pl.program_id(0)            # split index ("parallel" axis)
    i = pl.program_id(1)            # reduction step within the split
    b = s * steps_per_split + i     # unclamped block index

    @pl.when(i == 0)
    def _init():
        swt_ref[...] = jnp.zeros_like(swt_ref)
        sw_ref[...] = jnp.zeros_like(sw_ref)
        st_ref[...] = jnp.zeros_like(st_ref)

    n_chunks = tile_r // chunk_r

    def accum_chunk(r0, masked):
        o = o_ref[pl.ds(r0, chunk_r), :].astype(jnp.float32)
        t = t_ref[pl.ds(r0, chunk_r), :].astype(jnp.float32)
        if apply_sigmoid:
            # sigmoid(x) = 0.5*tanh(0.5*x) + 0.5; the affine part is applied
            # in the wrapper epilogue, so only tanh(0.5*x) is accumulated.
            w = jnp.tanh(0.5 * o)
        else:
            w = o
        if masked:
            # Rows >= m_rows belong to the partial last block's undefined
            # region.  Mask BEFORE any product so NaN/Inf garbage cannot leak
            # into the sums (jnp.where is a true select).
            rows = b * tile_r + r0 + jax.lax.broadcasted_iota(
                jnp.int32, (chunk_r, LANE), 0)
            valid = rows < m_rows
            w = jnp.where(valid, w, 0.0)
            t = jnp.where(valid, t, 0.0)
        # (chunk_r,128) -> (chunk_r//8,8,128) is (8,128)-tile aligned => free;
        # the axis-0 sum is pure VPU vreg adds into the resident accumulators.
        swt_ref[...] += jnp.sum((w * t).reshape(chunk_r // 8, 8, LANE), axis=0)
        sw_ref[...] += jnp.sum(w.reshape(chunk_r // 8, 8, LANE), axis=0)
        st_ref[...] += jnp.sum(t.reshape(chunk_r // 8, 8, LANE), axis=0)

    def accumulate(masked):
        if n_chunks == 1:
            accum_chunk(0, masked)
        else:
            def body(c, carry):
                accum_chunk(pl.multiple_of(c * chunk_r, chunk_r), masked)
                return carry
            jax.lax.fori_loop(0, n_chunks, body, 0,
                              unroll=True if n_chunks <= 8 else 4)

    if not need_mask:
        accumulate(masked=False)
    else:
        @pl.when(b < nblocks_real - 1)
        def _interior():               # unmasked fast path for interior blocks
            accumulate(masked=False)

        @pl.when(jnp.logical_and(b >= nblocks_real - 1, b < nblocks_real))
        def _boundary():               # only the last real block pays the mask
            accumulate(masked=True)
        # b >= nblocks_real (dead tail steps of a split): skip compute.


def iou_loss(outputs, targets, *, eps=1e-7, threshold=None,
             activation="Sigmoid"):
    """Pallas IoU (Jaccard) loss.  Returns a float32 scalar."""
    assert outputs.shape == targets.shape
    if activation not in ("none", "Sigmoid"):
        # TODO(synk): 'Softmax2d' (channel softmax) activation not implemented.
        raise NotImplementedError(f"activation={activation}")
    if threshold is not None:
        # TODO(synk): binarization threshold (outputs > t).float() not implemented.
        raise NotImplementedError("threshold is not supported")
    apply_sigmoid = activation == "Sigmoid"

    n = 1
    for d in outputs.shape:
        n *= d
    n_main = (n // LANE) * LANE
    tail = n - n_main

    o_flat = outputs.reshape(-1)
    t_flat = targets.reshape(-1)

    s_wt = s_w = s_t = jnp.float32(0.0)
    if n_main:
        # Lane-dense (m, 128) view -- a free reshape when n is 128-aligned.
        o2 = (o_flat if tail == 0 else o_flat[:n_main]).reshape(-1, LANE)
        t2 = (t_flat if tail == 0 else t_flat[:n_main]).reshape(-1, LANE)
        m = o2.shape[0]

        bytes_per_row = LANE * (o2.dtype.itemsize + t2.dtype.itemsize)
        r8 = ((m + 7) // 8) * 8
        if r8 <= 2 * CHUNK_R:
            tile_r = r8
            chunk_r = r8
        else:
            chunk_r = CHUNK_R
            budget_rows = max(
                chunk_r,
                (_step_bytes_budget() // bytes_per_row) // chunk_r * chunk_r)
            tile_r = min(budget_rows, max(chunk_r, (r8 // chunk_r) * chunk_r))

        nblocks_real = pl.cdiv(m, tile_r)
        num_splits = min(_tensorcores_per_device(), nblocks_real)
        steps_per_split = pl.cdiv(nblocks_real, num_splits)
        need_mask = num_splits * steps_per_split * tile_r != m

        def in_index(s, i):
            # Dead tail steps (only when num_splits > 1) re-read the last real
            # block; their contribution is skipped inside the kernel.
            b = jnp.minimum(s * steps_per_split + i, nblocks_real - 1)
            return (b, 0)

        kernel = functools.partial(
            _iou_partial_kernel, tile_r=tile_r, chunk_r=chunk_r,
            steps_per_split=steps_per_split, nblocks_real=nblocks_real,
            m_rows=m, need_mask=need_mask, apply_sigmoid=apply_sigmoid)

        acc_shape = jax.ShapeDtypeStruct((num_splits, 8, LANE), jnp.float32)
        acc_spec = pl.BlockSpec((None, 8, LANE), lambda s, i: (s, 0, 0))

        # Raise the scoped-VMEM limit only when the double-buffered input
        # tiles actually need it (large-tile v6e/v7x configurations).
        in_buffer_bytes = 2 * tile_r * bytes_per_row
        compiler_kwargs = dict(dimension_semantics=("parallel", "arbitrary"))
        if in_buffer_bytes > 12 * _MIB:
            compiler_kwargs["vmem_limit_bytes"] = in_buffer_bytes + 16 * _MIB

        swt_p, sw_p, st_p = pl.pallas_call(
            kernel,
            out_shape=(acc_shape, acc_shape, acc_shape),
            grid_spec=pltpu.PrefetchScalarGridSpec(
                num_scalar_prefetch=0,
                grid=(num_splits, steps_per_split),
                in_specs=[pl.BlockSpec((tile_r, LANE), in_index),
                          pl.BlockSpec((tile_r, LANE), in_index)],
                out_specs=[acc_spec, acc_spec, acc_spec],
            ),
            compiler_params=pltpu.CompilerParams(**compiler_kwargs),
        )(o2, t2)

        s_wt = jnp.sum(swt_p)
        s_w = jnp.sum(sw_p)
        s_t = jnp.sum(st_p)

    # Scalar epilogue: re-apply sigmoid's hoisted affine part analytically.
    if apply_sigmoid:
        inter_main = 0.5 * s_wt + 0.5 * s_t
        sum_p_main = 0.5 * s_w + 0.5 * jnp.float32(n_main)
    else:
        inter_main = s_wt
        sum_p_main = s_w
    sum_t_main = s_t

    inter_tail = sum_p_tail = sum_t_tail = jnp.float32(0.0)
    if tail:
        o_tail = o_flat[n_main:].astype(jnp.float32)
        t_tail = t_flat[n_main:].astype(jnp.float32)
        p_tail = jax.nn.sigmoid(o_tail) if apply_sigmoid else o_tail
        inter_tail = jnp.sum(p_tail * t_tail)
        sum_p_tail = jnp.sum(p_tail)
        sum_t_tail = jnp.sum(t_tail)

    intersection = inter_main + inter_tail
    union = (sum_p_main + sum_p_tail) + (sum_t_main + sum_t_tail)
    iou = (intersection + eps) / (union - intersection + eps)
    return (1.0 - iou).astype(jnp.float32)


def _iou_loss_ref(outputs, targets, eps=1e-7, activation="Sigmoid"):
    o = outputs.astype(jnp.float32)
    p = jax.nn.sigmoid(o) if activation == "Sigmoid" else o
    t = targets.astype(jnp.float32)
    intersection = jnp.sum(p * t)
    union = jnp.sum(p) + jnp.sum(t)
    return 1.0 - (intersection + eps) / (union - intersection + eps)


if __name__ == "__main__":
    key = jax.random.PRNGKey(0)
    cases = [
        ((2, 4, 16, 16), "Sigmoid"),   # 2048 elems: 128-aligned fast path
        ((3, 5, 7, 9), "Sigmoid"),     # 945 elems: ragged lane tail + row mask
        ((4, 4, 64, 80), "none"),      # 81920 elems: multi-block + chunk loop
    ]
    for shape, act in cases:
        key, k_o, k_t = jax.random.split(key, 3)
        if act == "Sigmoid":
            outputs = jax.random.normal(k_o, shape, dtype=jnp.float32)
        else:
            outputs = jax.random.uniform(k_o, shape, dtype=jnp.float32)
        targets = (jax.random.uniform(k_t, shape) > 0.5).astype(jnp.float32)

        loss = jax.block_until_ready(iou_loss(outputs, targets, activation=act))
        ref = _iou_loss_ref(outputs, targets, activation=act)
        assert jnp.allclose(loss, ref, atol=1e-5, rtol=1e-4), (shape, act, loss, ref)

    print("KERNEL_OK")
</pallas_src>

<mosaic_0001>
module attributes {stable_mosaic.version = 11 : i64} {
  func.func @_iou_partial_kernel(%arg0: i32, %arg1: i32, %arg2: memref<16x128xf32, #tpu.memory_space<vmem>>, %arg3: memref<16x128xf32, #tpu.memory_space<vmem>>, %arg4: memref<1x8x128xf32, #tpu.memory_space<vmem>>, %arg5: memref<1x8x128xf32, #tpu.memory_space<vmem>>, %arg6: memref<1x8x128xf32, #tpu.memory_space<vmem>>) attributes {dimension_semantics = [#tpu.dimension_semantics<parallel>, #tpu.dimension_semantics<arbitrary>], iteration_bounds = array<i64: 1, 1>, scalar_prefetch = 0 : i64, scratch_operands = 0 : i64, tpu.core_type = #tpu.core_type<tc>, window_params = [{transform_indices = @transform_0, window_bounds = array<i64: 16, 128>}, {transform_indices = @transform_1, window_bounds = array<i64: 16, 128>}, {transform_indices = @transform_2, window_bounds = array<i64: 1, 8, 128>}, {transform_indices = @transform_3, window_bounds = array<i64: 1, 8, 128>}, {transform_indices = @transform_4, window_bounds = array<i64: 1, 8, 128>}]} {
    %c0_i32 = arith.constant 0 : i32
    %0 = arith.cmpi eq, %arg1, %c0_i32 : i32
    %1 = arith.extui %0 : i1 to i32
    %c0_i32_0 = arith.constant 0 : i32
    %2 = arith.cmpi ne, %1, %c0_i32_0 : i32
    scf.if %2 {
      %cst_25 = arith.constant 0.000000e+00 : f32
      %33 = vector.broadcast %cst_25 : f32 to vector<8x128xf32>
      %c0_26 = arith.constant 0 : index
      %c0_27 = arith.constant 0 : index
      %c0_28 = arith.constant 0 : index
      %34 = vector.load %arg4[%c0_26, %c0_27, %c0_28] : memref<1x8x128xf32, #tpu.memory_space<vmem>>, vector<1x8x128xf32>
      %35 = vector.shape_cast %34 : vector<1x8x128xf32> to vector<8x128xf32>
      %36 = vector.shape_cast %33 : vector<8x128xf32> to vector<1x8x128xf32>
      tpu.vector_store %arg4[%c0_26, %c0_27, %c0_28], %36 {strides = array<i32>} : memref<1x8x128xf32, #tpu.memory_space<vmem>>, vector<1x8x128xf32>,
      %cst_29 = arith.constant 0.000000e+00 : f32
      %37 = vector.broadcast %cst_29 : f32 to vector<8x128xf32>
      %c0_30 = arith.constant 0 : index
      %c0_31 = arith.constant 0 : index
      %c0_32 = arith.constant 0 : index
      %38 = vector.load %arg5[%c0_30, %c0_31, %c0_32] : memref<1x8x128xf32, #tpu.memory_space<vmem>>, vector<1x8x128xf32>
      %39 = vector.shape_cast %38 : vector<1x8x128xf32> to vector<8x128xf32>
      %40 = vector.shape_cast %37 : vector<8x128xf32> to vector<1x8x128xf32>
      tpu.vector_store %arg5[%c0_30, %c0_31, %c0_32], %40 {strides = array<i32>} : memref<1x8x128xf32, #tpu.memory_space<vmem>>, vector<1x8x128xf32>,
      %cst_33 = arith.constant 0.000000e+00 : f32
      %41 = vector.broadcast %cst_33 : f32 to vector<8x128xf32>
      %c0_34 = arith.constant 0 : index
      %c0_35 = arith.constant 0 : index
      %c0_36 = arith.constant 0 : index
      %42 = vector.load %arg6[%c0_34, %c0_35, %c0_36] : memref<1x8x128xf32, #tpu.memory_space<vmem>>, vector<1x8x128xf32>
      %43 = vector.shape_cast %42 : vector<1x8x128xf32> to vector<8x128xf32>
      %44 = vector.shape_cast %41 : vector<8x128xf32> to vector<1x8x128xf32>
      tpu.vector_store %arg6[%c0_34, %c0_35, %c0_36], %44 {strides = array<i32>} : memref<1x8x128xf32, #tpu.memory_space<vmem>>, vector<1x8x128xf32>,
    } else {
    }
    %c0 = arith.constant 0 : index
    %c0_1 = arith.constant 0 : index
    %3 = vector.load %arg2[%c0, %c0_1] : memref<16x128xf32, #tpu.memory_space<vmem>>, vector<16x128xf32>
    %c0_2 = arith.constant 0 : index
    %c0_3 = arith.constant 0 : index
    %4 = vector.load %arg3[%c0_2, %c0_3] : memref<16x128xf32, #tpu.memory_space<vmem>>, vector<16x128xf32>
    %cst = arith.constant 5.000000e-01 : f32
    %5 = vector.broadcast %cst : f32 to vector<16x128xf32>
    %6 = arith.mulf %5, %3 : vector<16x128xf32>
    %7 = math.tanh %6 : vector<16x128xf32>
    %c0_4 = arith.constant 0 : index
    %c0_5 = arith.constant 0 : index
    %c0_6 = arith.constant 0 : index
    %8 = vector.load %arg4[%c0_4, %c0_5, %c0_6] : memref<1x8x128xf32, #tpu.memory_space<vmem>>, vector<1x8x128xf32>
    %9 = vector.shape_cast %8 : vector<1x8x128xf32> to vector<8x128xf32>
    %10 = arith.mulf %7, %4 : vector<16x128xf32>
    %11 = vector.shape_cast %10 : vector<16x128xf32> to vector<2x8x128xf32>
    %cst_7 = arith.constant dense<0.000000e+00> : vector<8x128xf32>
    %12 = vector.multi_reduction <add>, %11, %cst_7 [0] : vector<2x8x128xf32> to vector<8x128xf32>
    %13 = arith.addf %9, %12 : vector<8x128xf32>
    %c0_8 = arith.constant 0 : index
    %c0_9 = arith.constant 0 : index
    %c0_10 = arith.constant 0 : index
    %14 = vector.load %arg4[%c0_8, %c0_9, %c0_10] : memref<1x8x128xf32, #tpu.memory_space<vmem>>, vector<1x8x128xf32>
    %15 = vector.shape_cast %14 : vector<1x8x128xf32> to vector<8x128xf32>
    %16 = vector.shape_cast %13 : vector<8x128xf32> to vector<1x8x128xf32>
    tpu.vector_store %arg4[%c0_8, %c0_9, %c0_10], %16 {strides = array<i32>} : memref<1x8x128xf32, #tpu.memory_space<vmem>>, vector<1x8x128xf32>,
    %c0_11 = arith.constant 0 : index
    %c0_12 = arith.constant 0 : index
    %c0_13 = arith.constant 0 : index
    %17 = vector.load %arg5[%c0_11, %c0_12, %c0_13] : memref<1x8x128xf32, #tpu.memory_space<vmem>>, vector<1x8x128xf32>
    %18 = vector.shape_cast %17 : vector<1x8x128xf32> to vector<8x128xf32>
    %19 = vector.shape_cast %7 : vector<16x128xf32> to vector<2x8x128xf32>
    %cst_14 = arith.constant dense<0.000000e+00> : vector<8x128xf32>
    %20 = vector.multi_reduction <add>, %19, %cst_14 [0] : vector<2x8x128xf32> to vector<8x128xf32>
    %21 = arith.addf %18, %20 : vector<8x128xf32>
    %c0_15 = arith.constant 0 : index
    %c0_16 = arith.constant 0 : index
    %c0_17 = arith.constant 0 : index
    %22 = vector.load %arg5[%c0_15, %c0_16, %c0_17] : memref<1x8x128xf32, #tpu.memory_space<vmem>>, vector<1x8x128xf32>
    %23 = vector.shape_cast %22 : vector<1x8x128xf32> to vector<8x128xf32>
    %24 = vector.shape_cast %21 : vector<8x128xf32> to vector<1x8x128xf32>
    tpu.vector_store %arg5[%c0_15, %c0_16, %c0_17], %24 {strides = array<i32>} : memref<1x8x128xf32, #tpu.memory_space<vmem>>, vector<1x8x128xf32>,
    %c0_18 = arith.constant 0 : index
    %c0_19 = arith.constant 0 : index
    %c0_20 = arith.constant 0 : index
    %25 = vector.load %arg6[%c0_18, %c0_19, %c0_20] : memref<1x8x128xf32, #tpu.memory_space<vmem>>, vector<1x8x128xf32>
    %26 = vector.shape_cast %25 : vector<1x8x128xf32> to vector<8x128xf32>
    %27 = vector.shape_cast %4 : vector<16x128xf32> to vector<2x8x128xf32>
    %cst_21 = arith.constant dense<0.000000e+00> : vector<8x128xf32>
    %28 = vector.multi_reduction <add>, %27, %cst_21 [0] : vector<2x8x128xf32> to vector<8x128xf32>
    %29 = arith.addf %26, %28 : vector<8x128xf32>
    %c0_22 = arith.constant 0 : index
    %c0_23 = arith.constant 0 : index
    %c0_24 = arith.constant 0 : index
    %30 = vector.load %arg6[%c0_22, %c0_23, %c0_24] : memref<1x8x128xf32, #tpu.memory_space<vmem>>, vector<1x8x128xf32>
    %31 = vector.shape_cast %30 : vector<1x8x128xf32> to vector<8x128xf32>
    %32 = vector.shape_cast %29 : vector<8x128xf32> to vector<1x8x128xf32>
    tpu.vector_store %arg6[%c0_22, %c0_23, %c0_24], %32 {strides = array<i32>} : memref<1x8x128xf32, #tpu.memory_space<vmem>>, vector<1x8x128xf32>,
    return
  }
  func.func @transform_0(%arg0: i32, %arg1: i32) -> (i32, i32) {
    %c1_i32 = arith.constant 1 : i32
    %0 = arith.muli %arg0, %c1_i32 : i32
    %1 = arith.addi %0, %arg1 : i32
    %c0_i32 = arith.constant 0 : i32
    %2 = arith.minsi %1, %c0_i32 : i32
    %c0_i32_0 = arith.constant 0 : i32
    %c0_i32_1 = arith.constant 0 : i32
    return %2, %c0_i32_0 : i32, i32
  }
  func.func @transform_1(%arg0: i32, %arg1: i32) -> (i32, i32) {
    %c1_i32 = arith.constant 1 : i32
    %0 = arith.muli %arg0, %c1_i32 : i32
    %1 = arith.addi %0, %arg1 : i32
    %c0_i32 = arith.constant 0 : i32
    %2 = arith.minsi %1, %c0_i32 : i32
    %c0_i32_0 = arith.constant 0 : i32
    %c0_i32_1 = arith.constant 0 : i32
    return %2, %c0_i32_0 : i32, i32
  }
  func.func @transform_2(%arg0: i32, %arg1: i32) -> (i32, i32, i32) {
    %c0_i32 = arith.constant 0 : i32
    %c0_i32_0 = arith.constant 0 : i32
    %c0_i32_1 = arith.constant 0 : i32
    return %arg0, %c0_i32, %c0_i32_0 : i32, i32, i32
  }
  func.func @transform_3(%arg0: i32, %arg1: i32) -> (i32, i32, i32) {
    %c0_i32 = arith.constant 0 : i32
    %c0_i32_0 = arith.constant 0 : i32
    %c0_i32_1 = arith.constant 0 : i32
    return %arg0, %c0_i32, %c0_i32_0 : i32, i32, i32
  }
  func.func @transform_4(%arg0: i32, %arg1: i32) -> (i32, i32, i32) {
    %c0_i32 = arith.constant 0 : i32
    %c0_i32_0 = arith.constant 0 : i32
    %c0_i32_1 = arith.constant 0 : i32
    return %arg0, %c0_i32, %c0_i32_0 : i32, i32, i32
  }
}

</mosaic_0001>

<llo_original>
// kernel: tpu_custom_call.1
$region0: #{tpu_custom_call.1}
  #allocation0 [shape = 'u32[]', space=smem, size = 0x4, offset = 0x4, fixed_abs, tag = 'smem constant byte address 0x4 - core index']
  #allocation1 [shape = 'u32[144,128]{1,0:T(1,128)}', space=vmem, size = 0x12000, scoped, tag = 'internal scratch']
  %s0 = inlined_call_operand.hbm [shape: f32[16,128], index: 0, kind: input, shape index: {}]
  %s1 = inlined_call_operand.hbm [shape: f32[16,128], index: 1, kind: input, shape index: {}]
  %s2 = inlined_call_operand.hbm [shape: f32[1,8,128], index: 2, kind: output, shape index: {0}]
  %s3 = inlined_call_operand.hbm [shape: f32[1,8,128], index: 3, kind: output, shape index: {1}]
  %s4 = inlined_call_operand.hbm [shape: f32[1,8,128], index: 4, kind: output, shape index: {2}]
  %5 = xla_tuple %s2, %s3, %s4
  %s6 = sld [smem:[#allocation0]]
  $region46: #{tpu_custom_call.1} parent=0
    _
  %s8 = ssub.s32 1, %s6
  %s9 = scalar_select 0, %s8, %s6
  $region1: #{tpu_custom_call.1} parent=0
    #allocation2 [shape = 'u8[8192]{0}', space=vmem, size = 0x2000, scoped, tag = 'input window, operand 0, single buffered']
    #allocation3 [shape = 's32[1]{0}', space=sflag, size = 0x4, scoped, tag = 'scoped memory for tpu_custom_call.1']
    #allocation4 [shape = 's32[1]{0}', space=sflag, size = 0x4, scoped, tag = 'scoped memory for tpu_custom_call.1']
    #allocation5 [shape = 'u8[8192]{0}', space=vmem, size = 0x2000, scoped, tag = 'input window, operand 1, single buffered']
    #allocation6 [shape = 's32[1]{0}', space=sflag, size = 0x4, scoped, tag = 'scoped memory for tpu_custom_call.1']
    #allocation7 [shape = 'u8[4096]{0}', space=vmem, size = 0x1000, scoped, tag = 'output window, operand 0, single buffered']
    #allocation8 [shape = 'u8[4096]{0}', space=vmem, size = 0x1000, scoped, tag = 'output window, operand 1, single buffered']
    #allocation9 [shape = 's32[1]{0}', space=sflag, size = 0x4, scoped, tag = 'scoped memory for tpu_custom_call.1']
    #allocation10 [shape = 'u8[4096]{0}', space=vmem, size = 0x1000, scoped, tag = 'output window, operand 2, single buffered']
    %10 = vsyncpa [#allocation3], 0
    %11 = vsyncpa [#allocation6], 0
    %12 = vsyncpa [#allocation4], 0
    %13 = vsyncpa [#allocation9], 0
    // Predicated region
    $region2: #{tpu_custom_call.1} parent=1 // pred_check
      _
    $region3: #{tpu_custom_call.1} parent=1 // pred_check_branch
      %15 = sbr.rel (0) target = $region5
    $region4: #{tpu_custom_call.1} parent=1 // pred_region
      %s16 = sadd.s32 0, 0
      %p17 = scmp.lt.s32.totalorder %s16, 0
      %s18 = scalar_select %p17, %s16, 0
      %s19 = smul.u32 2, %s18
      %s21 = ssub.s32 256, 256
      %22 = vsyncadd [#allocation3], %s21
      %s23 = smul.addr %s19, 128
      %s24 = scalar_lea.hbm %s0, %s23
      %s25 = sshll.u32 [#allocation2], 4
      %s26 = int_to_ptr.vmem [resolvable:$true] %s25
      %31 = dma.hbm_to_vmem [thread:$0]  %s24, 256, %s26, [#allocation3], 128, 128, 8
    $region5: #{tpu_custom_call.1} parent=1 // pred_fallthru
      _
    // Predicated region
    $region6: #{tpu_custom_call.1} parent=1 // pred_check
      _
    $region7: #{tpu_custom_call.1} parent=1 // pred_check_branch
      %33 = sbr.rel (0) target = $region9
    $region8: #{tpu_custom_call.1} parent=1 // pred_region
      %s34 = sadd.s32 0, 0
      %p35 = scmp.lt.s32.totalorder %s34, 0
      %s36 = scalar_select %p35, %s34, 0
      %s37 = smul.u32 2, %s36
      %s39 = ssub.s32 256, 256
      %40 = vsyncadd [#allocation6], %s39
      %s41 = smul.addr %s37, 128
      %s42 = scalar_lea.hbm %s1, %s41
      %s43 = sshll.u32 [#allocation5], 4
      %s44 = int_to_ptr.vmem [resolvable:$true] %s43
      %49 = dma.hbm_to_vmem [thread:$0]  %s42, 256, %s44, [#allocation6], 128, 128, 8
    $region9: #{tpu_custom_call.1} parent=1 // pred_fallthru
      _
    // Predicated region
    $region10: #{tpu_custom_call.1} parent=1 // pred_check
      _
    $region11: #{tpu_custom_call.1} parent=1 // pred_check_branch
      %51 = sbr.rel (0) target = $region13
    $region12: #{tpu_custom_call.1} parent=1 // pred_region
      %52 = dma.done [#allocation3], 256
    $region13: #{tpu_custom_call.1} parent=1 // pred_fallthru
      _
    // Predicated region
    $region14: #{tpu_custom_call.1} parent=1 // pred_check
      _
    $region15: #{tpu_custom_call.1} parent=1 // pred_check_branch
      %54 = sbr.rel (0) target = $region17
    $region16: #{tpu_custom_call.1} parent=1 // pred_region
      %55 = dma.done [#allocation6], 256
    $region17: #{tpu_custom_call.1} parent=1 // pred_fallthru
      _
    %s56 = sadd.s32 0, 0
    %p57 = scmp.lt.s32.totalorder %s56, 0
    %s58 = scalar_select %p57, %s56, 0
    %s59 = smul.u32 2, %s58
    %s60 = sadd.s32 0, 0
    %p61 = scmp.lt.s32.totalorder %s60, 0
    %s62 = scalar_select %p61, %s60, 0
    %s63 = smul.u32 2, %s62
    %p64 = scmp.eq.s32.totalorder 0, 0
    // Predicated region
    $region18: #{tpu_custom_call.1} parent=1 // pred_check
      %p65 = pneg %p64
    $region19: #{tpu_custom_call.1} parent=1 // pred_check_branch
      %67 = sbr.rel (%p65) target = $region21
    $region20: #{tpu_custom_call.1} parent=1 // pred_region
      %68 = vst [vmem:[#allocation7] sm:$0xff] 0.0
      %69 = vst [vmem:[#allocation8] sm:$0xff] 0.0
      %70 = vst [vmem:[#allocation10] sm:$0xff] 0.0
    $region21: #{tpu_custom_call.1} parent=1 // pred_fallthru
      _
    %v71 = vld [vmem:[#allocation2] sm:$0xff]
    %v72 = vld [vmem:[#allocation2 + $0x8] sm:$0xff]
    %v73 = vld [vmem:[#allocation5] sm:$0xff]
    %v74 = vld [vmem:[#allocation5 + $0x8] sm:$0xff]
    %v75 = vmul.f32 %v71, 0.5
    %v76 = vmul.f32 %v72, 0.5
    %v77 = vtanh.pop %v75
    %v78 = vtanh.pop %v76
    %v79 = vld [vmem:[#allocation7] sm:$0xff]
    %v80 = vmul.f32 %v77, %v73
    %v81 = vmul.f32 %v78, %v74
    %v82 = vadd.f32 %v80, %v81
    %v83 = vadd.f32 %v79, %v82
    %84 = vst [vmem:[#allocation7] sm:$0xff] %v83
    %v85 = vld [vmem:[#allocation8] sm:$0xff]
    %v86 = vadd.f32 %v77, %v78
    %v87 = vadd.f32 %v85, %v86
    %88 = vst [vmem:[#allocation8] sm:$0xff] %v87
    %v89 = vld [vmem:[#allocation10] sm:$0xff]
    %v90 = vadd.f32 %v73, %v74
    %v91 = vadd.f32 %v89, %v90
    %92 = vst [vmem:[#allocation10] sm:$0xff] %v91
    // Predicated region
    $region22: #{tpu_custom_call.1} parent=1 // pred_check
      _
    $region23: #{tpu_custom_call.1} parent=1 // pred_check_branch
      %94 = sbr.rel (0) target = $region25
    $region24: #{tpu_custom_call.1} parent=1 // pred_region
      %s96 = ssub.s32 128, 128
      %97 = vsyncadd [#allocation4], %s96
      %s99 = sshll.u32 [#allocation7], 4
      %s100 = int_to_ptr.vmem [resolvable:$true] %s99
      %102 = dma.vmem_to_hbm [thread:$0]  %s100, 128, %s2, [#allocation4]
    $region25: #{tpu_custom_call.1} parent=1 // pred_fallthru
      _
    // Predicated region
    $region26: #{tpu_custom_call.1} parent=1 // pred_check
      _
    $region27: #{tpu_custom_call.1} parent=1 // pred_check_branch
      %104 = sbr.rel (0) target = $region29
    $region28: #{tpu_custom_call.1} parent=1 // pred_region
      %s106 = ssub.s32 128, 128
      %107 = vsyncadd [#allocation9], %s106
      %s109 = sshll.u32 [#allocation8], 4
      %s110 = int_to_ptr.vmem [resolvable:$true] %s109
      %112 = dma.vmem_to_hbm [thread:$0]  %s110, 128, %s3, [#allocation9]
    $region29: #{tpu_custom_call.1} parent=1 // pred_fallthru
      _
    // Predicated region
    $region30: #{tpu_custom_call.1} parent=1 // pred_check
      _
    $region31: #{tpu_custom_call.1} parent=1 // pred_check_branch
      %114 = sbr.rel (0) target = $region33
    $region32: #{tpu_custom_call.1} parent=1 // pred_region
      %s116 = ssub.s32 128, 128
      %117 = vsyncadd [#allocation9], %s116
      %s119 = sshll.u32 [#allocation10], 4
      %s120 = int_to_ptr.vmem [resolvable:$true] %s119
      %122 = dma.vmem_to_hbm [thread:$0]  %s120, 128, %s4, [#allocation9]
    $region33: #{tpu_custom_call.1} parent=1 // pred_fallthru
      _
    // Predicated region
    $region34: #{tpu_custom_call.1} parent=1 // pred_check
      _
    $region35: #{tpu_custom_call.1} parent=1 // pred_check_branch
      %124 = sbr.rel (0) target = $region37
    $region36: #{tpu_custom_call.1} parent=1 // pred_region
      %125 = dma.done [#allocation4], 128
    $region37: #{tpu_custom_call.1} parent=1 // pred_fallthru
      _
    // Predicated region
    $region38: #{tpu_custom_call.1} parent=1 // pred_check
      _
    $region39: #{tpu_custom_call.1} parent=1 // pred_check_branch
      %127 = sbr.rel (0) target = $region41
    $region40: #{tpu_custom_call.1} parent=1 // pred_region
      %128 = dma.done [#allocation9], 128
    $region41: #{tpu_custom_call.1} parent=1 // pred_fallthru
      _
    // Predicated region
    $region42: #{tpu_custom_call.1} parent=1 // pred_check
      _
    $region43: #{tpu_custom_call.1} parent=1 // pred_check_branch
      %130 = sbr.rel (0) target = $region45
    $region44: #{tpu_custom_call.1} parent=1 // pred_region
      %131 = dma.done [#allocation9], 128
    $region45: #{tpu_custom_call.1} parent=1 // pred_fallthru
      _
    %132 = vsyncpa [#allocation3], 1
    %133 = vsyncpa [#allocation6], 1
    %134 = vsyncpa [#allocation4], 1
    %135 = vsyncpa [#allocation9], 1

</llo_original>
